<compile_context>
chip_gen: v6e
topology: v6e:2x2x1
jax: 0.10.0
libtpu: 0.0.40
codegen_flags: <defaults>
</compile_context>

<pallas_src>
import jax
import jax.numpy as jnp
from jax.experimental import pallas as pl
from jax.experimental.pallas import tpu as pltpu

EPS = 1e-6  # matches LayerNorm(x_size, eps=1e-06)


def sublayer_connection_kernel(x_ref, w_ref, b_ref, gamma_ref, beta_ref, o_ref):
    # x_ref: (TILE_ROWS, D), w_ref: (D, D) bf16 resident, b/gamma/beta: (1, D)
    x = x_ref[...]

    # sublayer(x) = x @ W + b  -- bf16 MXU inputs, f32 accumulation.
    s = jnp.dot(x.astype(w_ref.dtype), w_ref[...],
                preferred_element_type=jnp.float32)

    # residual: y = x + sublayer(x)   (f32)
    y = x.astype(jnp.float32) + s + b_ref[...].astype(jnp.float32)

    # LayerNorm with the reference module's semantics:
    #   mean = y.mean(-1); std = y.std(-1)  (unbiased, divide by N-1)
    #   out  = gamma * (y - mean) / (std + eps) + beta
    d_model = y.shape[-1]
    mean = jnp.mean(y, axis=-1, keepdims=True)
    centered = y - mean
    var_unbiased = jnp.sum(centered * centered, axis=-1, keepdims=True) * (
        1.0 / (d_model - 1))
    std = jnp.sqrt(var_unbiased)
    # Exact reciprocal of the per-row (TILE_ROWS, 1) column: essentially free
    # and avoids the EUP-approx error on the whole LayerNorm scale.
    inv = pl.reciprocal(std + EPS, approx=False)
    out = gamma_ref[...].astype(jnp.float32) * centered * inv \
        + beta_ref[...].astype(jnp.float32)

    # dropout: eval mode -> identity
    o_ref[...] = out.astype(o_ref.dtype)


def _round_up(n, m):
    return ((n + m - 1) // m) * m


def sublayer_connection(x, w, b, gamma, beta, *, tile_rows=None,
                        matmul_dtype=jnp.bfloat16, out_dtype=None):
    """x: [batch, seq, d_model] -> [batch, seq, d_model] (dtype = out_dtype or x.dtype)."""
    batch, seq, d_model = x.shape
    n_rows = batch * seq
    if out_dtype is None:
        out_dtype = x.dtype
    x2d = x.reshape(n_rows, d_model)  # metadata-only reshape

    # Row-tile selection: mem-bound kernel -> biggest tile that is sensible.
    # 2048 f32 rows @ d_model=128 is only 1 MiB per buffer.
    if tile_rows is None:
        tile_rows = 2048 if d_model <= 512 else 512
    eff_tile = min(tile_rows, _round_up(n_rows, 8))
    if n_rows > 8:
        # Keep at least 2 grid steps so a 2-TC (v7x) split has work to shard.
        eff_tile = min(eff_tile, _round_up(pl.cdiv(n_rows, 2), 8))
    eff_tile = max(8, (eff_tile // 8) * 8)
    grid_rows = pl.cdiv(n_rows, eff_tile)   # ragged last block: reads padded,
                                            # writes masked (LayerNorm is row-local)

    # Cast W once so the matmul takes the bf16 MXU path and the resident
    # weight block costs half the VMEM / HBM traffic.
    w_mm = w.astype(matmul_dtype)

    # Derive the scoped-VMEM budget from the real footprint (pipeline
    # double-buffers every operand) with ~2x headroom for compiler scratch.
    x_b = jnp.dtype(x.dtype).itemsize
    o_b = jnp.dtype(out_dtype).itemsize
    w_b = jnp.dtype(matmul_dtype).itemsize
    tile_io = eff_tile * d_model * (x_b + o_b)                 # one x + one out buffer
    const_bytes = d_model * d_model * w_b + 3 * d_model * 4    # W + b/gamma/beta
    vmem_limit = int(min(max(2 * (2 * tile_io + 2 * const_bytes), 8 * 2**20),
                         100 * 2**20))

    out2d = pl.pallas_call(
        sublayer_connection_kernel,
        out_shape=jax.ShapeDtypeStruct((n_rows, d_model), out_dtype),
        grid=(grid_rows,),
        in_specs=[
            pl.BlockSpec((eff_tile, d_model), lambda i: (i, 0)),   # x tile
            pl.BlockSpec((d_model, d_model), lambda i: (0, 0)),    # W (resident, bf16)
            pl.BlockSpec((1, d_model), lambda i: (0, 0)),          # b
            pl.BlockSpec((1, d_model), lambda i: (0, 0)),          # gamma
            pl.BlockSpec((1, d_model), lambda i: (0, 0)),          # beta
        ],
        out_specs=pl.BlockSpec((eff_tile, d_model), lambda i: (i, 0)),
        compiler_params=pltpu.CompilerParams(
            # Row blocks are independent; lets megacore/v7x shard the row grid.
            dimension_semantics=("parallel",),
            vmem_limit_bytes=vmem_limit,
        ),
    )(x2d, w_mm, b, gamma, beta)

    return out2d.reshape(batch, seq, d_model)


def _reference(x, w, b, gamma, beta, matmul_dtype=jnp.bfloat16):
    """Pure-JAX reference with the same bf16-matmul / f32-accumulate semantics."""
    batch, seq, d_model = x.shape
    x2d = x.reshape(-1, d_model).astype(jnp.float32)
    s = jnp.dot(x2d.astype(matmul_dtype), w.astype(matmul_dtype),
                preferred_element_type=jnp.float32)
    y = x2d + s + b.astype(jnp.float32)
    mean = y.mean(-1, keepdims=True)
    centered = y - mean
    std = jnp.sqrt((centered * centered).sum(-1, keepdims=True) / (d_model - 1))
    out = gamma.astype(jnp.float32) * centered / (std + EPS) + beta.astype(jnp.float32)
    return out.reshape(batch, seq, d_model)


if __name__ == "__main__":
    key = jax.random.PRNGKey(0)
    kx, kw, kb, kx2 = jax.random.split(key, 4)

    d_model = 128
    w = jax.random.normal(kw, (d_model, d_model), dtype=jnp.float32) * 0.02
    b = jax.random.normal(kb, (1, d_model), dtype=jnp.float32) * 0.02
    gamma = jnp.ones((1, d_model), dtype=jnp.float32)   # ones_tensor
    beta = jnp.zeros((1, d_model), dtype=jnp.float32)   # zeros_tensor

    # --- small case (typical module use): 2x8 rows, 2 grid steps of 8 rows ---
    batch, seq = 2, 8
    x = jax.random.normal(kx, (batch, seq, d_model), dtype=jnp.float32)
    out = jax.block_until_ready(sublayer_connection(x, w, b, gamma, beta))
    ref = _reference(x, w, b, gamma, beta)
    assert jnp.allclose(out.astype(jnp.float32), ref, atol=1e-2, rtol=1e-2), \
        "mismatch vs reference (small)"

    # --- ragged case: 300 rows -> tile 152, 2 grid steps, masked last block ---
    batch2, seq2 = 3, 100
    x_big = jax.random.normal(kx2, (batch2, seq2, d_model), dtype=jnp.float32)
    out_big = jax.block_until_ready(sublayer_connection(x_big, w, b, gamma, beta))
    ref_big = _reference(x_big, w, b, gamma, beta)
    assert jnp.allclose(out_big.astype(jnp.float32), ref_big, atol=1e-2, rtol=1e-2), \
        "mismatch vs reference (ragged)"

    # --- bf16-output path (halves write traffic when downstream accepts bf16) ---
    out_bf16 = jax.block_until_ready(
        sublayer_connection(x_big, w, b, gamma, beta, out_dtype=jnp.bfloat16))
    assert out_bf16.dtype == jnp.bfloat16
    assert jnp.allclose(out_bf16.astype(jnp.float32), ref_big, atol=5e-2, rtol=5e-2), \
        "mismatch vs reference (bf16 out)"

    print("KERNEL_OK")
</pallas_src>

<mosaic_0001>
module attributes {stable_mosaic.version = 11 : i64} {
  func.func @sublayer_connection_kernel(%arg0: i32, %arg1: memref<8x128xf32, #tpu.memory_space<vmem>>, %arg2: memref<128x128xbf16, #tpu.memory_space<vmem>>, %arg3: memref<1x128xf32, #tpu.memory_space<vmem>>, %arg4: memref<1x128xf32, #tpu.memory_space<vmem>>, %arg5: memref<1x128xf32, #tpu.memory_space<vmem>>, %arg6: memref<8x128xf32, #tpu.memory_space<vmem>>) attributes {dimension_semantics = [#tpu.dimension_semantics<parallel>], iteration_bounds = array<i64: 2>, scalar_prefetch = 0 : i64, scratch_operands = 0 : i64, tpu.core_type = #tpu.core_type<tc>, window_params = [{transform_indices = @transform_0, window_bounds = array<i64: 8, 128>}, {pipeline_mode = #tpu.pipeline_mode<synchronous>, transform_indices = @transform_1, window_bounds = array<i64: 128, 128>}, {pipeline_mode = #tpu.pipeline_mode<synchronous>, transform_indices = @transform_2, window_bounds = array<i64: 1, 128>}, {pipeline_mode = #tpu.pipeline_mode<synchronous>, transform_indices = @transform_3, window_bounds = array<i64: 1, 128>}, {pipeline_mode = #tpu.pipeline_mode<synchronous>, transform_indices = @transform_4, window_bounds = array<i64: 1, 128>}, {transform_indices = @transform_5, window_bounds = array<i64: 8, 128>}]} {
    %c0 = arith.constant 0 : index
    %c0_0 = arith.constant 0 : index
    %0 = vector.load %arg1[%c0, %c0_0] : memref<8x128xf32, #tpu.memory_space<vmem>>, vector<8x128xf32>
    %1 = arith.truncf %0 : vector<8x128xf32> to vector<8x128xbf16>
    %c0_1 = arith.constant 0 : index
    %c0_2 = arith.constant 0 : index
    %2 = vector.load %arg2[%c0_1, %c0_2] : memref<128x128xbf16, #tpu.memory_space<vmem>>, vector<128x128xbf16>
    %cst = arith.constant dense<0.000000e+00> : vector<8x128xf32>
    %3 = tpu.matmul %1, %2, %cst {dimension_numbers = #tpu.dot_dimension_numbers<[1], [0], [0], [1], [0, 0, 1, 1], [], []>} : vector<8x128xbf16>, vector<128x128xbf16>, vector<8x128xf32> -> vector<8x128xf32>
    %4 = arith.addf %0, %3 : vector<8x128xf32>
    %c0_3 = arith.constant 0 : index
    %c0_4 = arith.constant 0 : index
    %5 = vector.load %arg3[%c0_3, %c0_4] : memref<1x128xf32, #tpu.memory_space<vmem>>, vector<1x128xf32>
    %6 = vector.broadcast %5 : vector<1x128xf32> to vector<8x128xf32>
    %7 = arith.addf %4, %6 : vector<8x128xf32>
    %cst_5 = arith.constant dense<0.000000e+00> : vector<8xf32>
    %8 = vector.multi_reduction <add>, %7, %cst_5 [1] : vector<8x128xf32> to vector<8xf32>
    %9 = vector.shape_cast %8 : vector<8xf32> to vector<8x1xf32>
    %cst_6 = arith.constant 1.280000e+02 : f32
    %10 = vector.broadcast %cst_6 : f32 to vector<8x1xf32>
    %11 = arith.divf %9, %10 : vector<8x1xf32>
    %12 = vector.broadcast %11 : vector<8x1xf32> to vector<8x128xf32>
    %13 = arith.subf %7, %12 : vector<8x128xf32>
    %14 = arith.mulf %13, %13 : vector<8x128xf32>
    %cst_7 = arith.constant dense<0.000000e+00> : vector<8xf32>
    %15 = vector.multi_reduction <add>, %14, %cst_7 [1] : vector<8x128xf32> to vector<8xf32>
    %16 = vector.shape_cast %15 : vector<8xf32> to vector<8x1xf32>
    %cst_8 = arith.constant 0.00787401571 : f32
    %17 = vector.broadcast %cst_8 : f32 to vector<8x1xf32>
    %18 = arith.mulf %16, %17 : vector<8x1xf32>
    %19 = math.sqrt %18 : vector<8x1xf32>
    %cst_9 = arith.constant 9.99999997E-7 : f32
    %20 = vector.broadcast %cst_9 : f32 to vector<8x1xf32>
    %21 = arith.addf %19, %20 : vector<8x1xf32>
    %22 = tpu.reciprocal %21 : vector<8x1xf32> -> vector<8x1xf32>
    %c0_10 = arith.constant 0 : index
    %c0_11 = arith.constant 0 : index
    %23 = vector.load %arg4[%c0_10, %c0_11] : memref<1x128xf32, #tpu.memory_space<vmem>>, vector<1x128xf32>
    %24 = vector.broadcast %23 : vector<1x128xf32> to vector<8x128xf32>
    %25 = arith.mulf %24, %13 : vector<8x128xf32>
    %26 = vector.broadcast %22 : vector<8x1xf32> to vector<8x128xf32>
    %27 = arith.mulf %25, %26 : vector<8x128xf32>
    %c0_12 = arith.constant 0 : index
    %c0_13 = arith.constant 0 : index
    %28 = vector.load %arg5[%c0_12, %c0_13] : memref<1x128xf32, #tpu.memory_space<vmem>>, vector<1x128xf32>
    %29 = vector.broadcast %28 : vector<1x128xf32> to vector<8x128xf32>
    %30 = arith.addf %27, %29 : vector<8x128xf32>
    %c0_14 = arith.constant 0 : index
    %c0_15 = arith.constant 0 : index
    %31 = vector.load %arg6[%c0_14, %c0_15] : memref<8x128xf32, #tpu.memory_space<vmem>>, vector<8x128xf32>
    tpu.vector_store %arg6[%c0_14, %c0_15], %30 {strides = array<i32>} : memref<8x128xf32, #tpu.memory_space<vmem>>, vector<8x128xf32>,
    return
  }
  func.func @transform_0(%arg0: i32) -> (i32, i32) {
    %c0_i32 = arith.constant 0 : i32
    %c0_i32_0 = arith.constant 0 : i32
    return %arg0, %c0_i32 : i32, i32
  }
  func.func @transform_1(%arg0: i32) -> (i32, i32) {
    %c0_i32 = arith.constant 0 : i32
    %c0_i32_0 = arith.constant 0 : i32
    %c0_i32_1 = arith.constant 0 : i32
    return %c0_i32, %c0_i32_0 : i32, i32
  }
  func.func @transform_2(%arg0: i32) -> (i32, i32) {
    %c0_i32 = arith.constant 0 : i32
    %c0_i32_0 = arith.constant 0 : i32
    %c0_i32_1 = arith.constant 0 : i32
    return %c0_i32, %c0_i32_0 : i32, i32
  }
  func.func @transform_3(%arg0: i32) -> (i32, i32) {
    %c0_i32 = arith.constant 0 : i32
    %c0_i32_0 = arith.constant 0 : i32
    %c0_i32_1 = arith.constant 0 : i32
    return %c0_i32, %c0_i32_0 : i32, i32
  }
  func.func @transform_4(%arg0: i32) -> (i32, i32) {
    %c0_i32 = arith.constant 0 : i32
    %c0_i32_0 = arith.constant 0 : i32
    %c0_i32_1 = arith.constant 0 : i32
    return %c0_i32, %c0_i32_0 : i32, i32
  }
  func.func @transform_5(%arg0: i32) -> (i32, i32) {
    %c0_i32 = arith.constant 0 : i32
    %c0_i32_0 = arith.constant 0 : i32
    return %arg0, %c0_i32 : i32, i32
  }
}

</mosaic_0001>

<llo_original>
// kernel: tpu_custom_call.1
$region0: #{tpu_custom_call.1}
  #allocation0 [shape = 'u32[]', space=smem, size = 0x4, offset = 0x4, fixed_abs, tag = 'smem constant byte address 0x4 - core index']
  #allocation1 [shape = 'u32[144,128]{1,0:T(1,128)}', space=vmem, size = 0x12000, scoped, tag = 'internal scratch']
  %s0 = inlined_call_operand.hbm [shape: f32[16,128], index: 0, kind: input, shape index: {}]
  %s1 = inlined_call_operand.hbm [shape: bf16[128,128], index: 1, kind: input, shape index: {}]
  %s2 = inlined_call_operand.vmem [shape: f32[1,128], index: 2, kind: input, shape index: {}]
  %s3 = inlined_call_operand.vmem [shape: f32[1,128], index: 3, kind: input, shape index: {}]
  %s4 = inlined_call_operand.vmem [shape: f32[1,128], index: 4, kind: input, shape index: {}]
  %s5 = inlined_call_operand.hbm [shape: f32[16,128], index: 5, kind: output, shape index: {}]
  %s6 = sld [smem:[#allocation0]]
  $region61: #{tpu_custom_call.1} parent=0
    _
  %s8 = ssub.s32 1, %s6
  %s9 = scalar_select 0, %s8, %s6
  $region1: #{tpu_custom_call.1} parent=0
    #allocation2 [shape = 'u8[8192]{0}', space=vmem, size = 0x2000, scoped, tag = 'input window, operand 0']
    #allocation3 [shape = 's32[2]{0}', space=sflag, size = 0x8, scoped, tag = 'scoped memory for tpu_custom_call.1']
    #allocation4 [shape = 's32[2]{0}', space=sflag, size = 0x8, scoped, tag = 'scoped memory for tpu_custom_call.1']
    #allocation5 [shape = 'u8[32768]{0}', space=vmem, size = 0x8000, scoped, tag = 'input window, operand 1, single buffered']
    #allocation6 [shape = 's32[1]{0}', space=sflag, size = 0x4, scoped, tag = 'scoped memory for tpu_custom_call.1']
    #allocation7 [shape = 'u8[8192]{0}', space=vmem, size = 0x2000, scoped, tag = 'output window, operand 0']
    %10 = vsyncpa [#allocation3], 0
    %s11 = scalar_lea.sflag [#allocation3], 1
    %12 = vsyncpa %s11, 0
    %13 = vsyncpa [#allocation6], 0
    %14 = vsyncpa [#allocation4], 0
    %s15 = scalar_lea.sflag [#allocation4], 1
    %16 = vsyncpa %s15, 0
    loop: start=0, step=1, limit=4
    $region2: #{tpu_custom_call.1} parent=1 // loop_pre_header
      _
    $region3: #{tpu_custom_call.1} parent=1 // loop_header
      %s18 = sphi 0, %s22
      %p19 = scmp.ge.s32.totalorder %s18, 4
      %s28 = sphi 0, %s30
      %s31 = sphi 0, %s28
      %s32 = sphi 0, %s31
      %s48 = sphi 0, %s32
      %s52 = sphi 0, %s52
      %s54 = sphi 0, %s52
      %s55 = sphi 0, %s54
      %s69 = sphi 0, %s55
      %s73 = sphi 0, %s73
      %s75 = sphi 0, %s73
      %s76 = sphi 0, %s75
      %s90 = sphi 0, %s76
      %s94 = sphi 0, %s94
      %s96 = sphi 0, %s94
      %s97 = sphi 0, %s96
      %s111 = sphi 0, %s97
      %s115 = sphi 0, %s115
      %s117 = sphi 0, %s115
      %s118 = sphi 0, %s117
      %s132 = sphi 0, %s118
      %s138 = sphi 0, %s140
      %s141 = sphi 0, %s138
      %s142 = sphi 0, %s141
      %s158 = sphi 0, %s142
    $region4: #{tpu_custom_call.1} parent=1 // loop_header_branch
      %21 = sbr.rel (%p19) target = $region8
    $region5: #{tpu_custom_call.1} parent=1 // loop_body
      %s23 = ssub.s32 %s18, 1
      %s24 = ssub.s32 %s18, 2
      %s25 = sadd.s32 %s18, 1
      %s26 = ssub.s32 %s18, %s25
      %p27 = scmp.eq.s32.totalorder %s26, 0
      %s29 = sadd.s32 %s28, 1
      %s30 = scalar_select %p27, %s28, %s29
      %p33 = pneg %p27
      %p34 = scmp.eq.s32.totalorder %s18, 1
      %p35 = por %p33, %p34
      %p36 = scmp.ne.s32.totalorder %s28, %s31
      %p37 = scmp.eq.s32.totalorder %s18, 0
      %p38 = por %p36, %p37
      %p39 = scmp.ne.s32.totalorder %s28, %s31
      %p40 = scmp.eq.s32.totalorder %s23, 1
      %p41 = por %p39, %p40
      %p42 = scmp.ne.s32.totalorder %s31, %s32
      %p43 = scmp.eq.s32.totalorder %s23, 0
      %p44 = por %p42, %p43
      %p45 = scmp.ne.s32.totalorder %s31, %s32
      %p46 = scmp.eq.s32.totalorder %s24, 1
      %p47 = por %p45, %p46
      %p49 = scmp.ne.s32.totalorder %s32, %s48
      %p50 = scmp.eq.s32.totalorder %s24, 0
      %p51 = por %p49, %p50
      %s53 = sadd.s32 %s52, 1
      %p56 = scmp.eq.s32.totalorder %s18, 1
      %p57 = scmp.ne.s32.totalorder %s52, %s54
      %p58 = scmp.eq.s32.totalorder %s18, 0
      %p59 = por %p57, %p58
      %p60 = scmp.ne.s32.totalorder %s52, %s54
      %p61 = scmp.eq.s32.totalorder %s23, 1
      %p62 = por %p60, %p61
      %p63 = scmp.ne.s32.totalorder %s54, %s55
      %p64 = scmp.eq.s32.totalorder %s23, 0
      %p65 = por %p63, %p64
      %p66 = scmp.ne.s32.totalorder %s54, %s55
      %p67 = scmp.eq.s32.totalorder %s24, 1
      %p68 = por %p66, %p67
      %p70 = scmp.ne.s32.totalorder %s55, %s69
      %p71 = scmp.eq.s32.totalorder %s24, 0
      %p72 = por %p70, %p71
      %s74 = sadd.s32 %s73, 1
      %p77 = scmp.eq.s32.totalorder %s18, 1
      %p78 = scmp.ne.s32.totalorder %s73, %s75
      %p79 = scmp.eq.s32.totalorder %s18, 0
      %p80 = por %p78, %p79
      %p81 = scmp.ne.s32.totalorder %s73, %s75
      %p82 = scmp.eq.s32.totalorder %s23, 1
      %p83 = por %p81, %p82
      %p84 = scmp.ne.s32.totalorder %s75, %s76
      %p85 = scmp.eq.s32.totalorder %s23, 0
      %p86 = por %p84, %p85
      %p87 = scmp.ne.s32.totalorder %s75, %s76
      %p88 = scmp.eq.s32.totalorder %s24, 1
      %p89 = por %p87, %p88
      %p91 = scmp.ne.s32.totalorder %s76, %s90
      %p92 = scmp.eq.s32.totalorder %s24, 0
      %p93 = por %p91, %p92
      %s95 = sadd.s32 %s94, 1
      %p98 = scmp.eq.s32.totalorder %s18, 1
      %p99 = scmp.ne.s32.totalorder %s94, %s96
      %p100 = scmp.eq.s32.totalorder %s18, 0
      %p101 = por %p99, %p100
      %p102 = scmp.ne.s32.totalorder %s94, %s96
      %p103 = scmp.eq.s32.totalorder %s23, 1
      %p104 = por %p102, %p103
      %p105 = scmp.ne.s32.totalorder %s96, %s97
      %p106 = scmp.eq.s32.totalorder %s23, 0
      %p107 = por %p105, %p106
      %p108 = scmp.ne.s32.totalorder %s96, %s97
      %p109 = scmp.eq.s32.totalorder %s24, 1
      %p110 = por %p108, %p109
      %p112 = scmp.ne.s32.totalorder %s97, %s111
      %p113 = scmp.eq.s32.totalorder %s24, 0
      %p114 = por %p112, %p113
      %s116 = sadd.s32 %s115, 1
      %p119 = scmp.eq.s32.totalorder %s18, 1
      %p120 = scmp.ne.s32.totalorder %s115, %s117
      %p121 = scmp.eq.s32.totalorder %s18, 0
      %p122 = por %p120, %p121
      %p123 = scmp.ne.s32.totalorder %s115, %s117
      %p124 = scmp.eq.s32.totalorder %s23, 1
      %p125 = por %p123, %p124
      %p126 = scmp.ne.s32.totalorder %s117, %s118
      %p127 = scmp.eq.s32.totalorder %s23, 0
      %p128 = por %p126, %p127
      %p129 = scmp.ne.s32.totalorder %s117, %s118
      %p130 = scmp.eq.s32.totalorder %s24, 1
      %p131 = por %p129, %p130
      %p133 = scmp.ne.s32.totalorder %s118, %s132
      %p134 = scmp.eq.s32.totalorder %s24, 0
      %p135 = por %p133, %p134
      %s136 = ssub.s32 %s18, %s25
      %p137 = scmp.eq.s32.totalorder %s136, 0
      %s139 = sadd.s32 %s138, 1
      %s140 = scalar_select %p137, %s138, %s139
      %p143 = pneg %p137
      %p144 = scmp.eq.s32.totalorder %s18, 1
      %p145 = por %p143, %p144
      %p146 = scmp.ne.s32.totalorder %s138, %s141
      %p147 = scmp.eq.s32.totalorder %s18, 0
      %p148 = por %p146, %p147
      %p149 = scmp.ne.s32.totalorder %s138, %s141
      %p150 = scmp.eq.s32.totalorder %s23, 1
      %p151 = por %p149, %p150
      %p152 = scmp.ne.s32.totalorder %s141, %s142
      %p153 = scmp.eq.s32.totalorder %s23, 0
      %p154 = por %p152, %p153
      %p155 = scmp.ne.s32.totalorder %s141, %s142
      %p156 = scmp.eq.s32.totalorder %s24, 1
      %p157 = por %p155, %p156
      %p159 = scmp.ne.s32.totalorder %s142, %s158
      %p160 = scmp.eq.s32.totalorder %s24, 0
      %p161 = por %p159, %p160
      %p162 = scmp.le.s32.totalorder 1, %s18
      %p163 = scmp.lt.s32.totalorder %s18, 3
      %p164 = pnand %p162, %p163
      %p165 = pneg %p164
      // Predicated region
      $region9: #{tpu_custom_call.1} parent=5 // pred_check
        _
      $region10: #{tpu_custom_call.1} parent=5 // pred_check_branch
        %167 = sbr.rel (%p164) target = $region12
      $region11: #{tpu_custom_call.1} parent=5 // pred_region
        %s168 = ssub.s32 %s18, 1
        // Predicated region
        $region13: #{tpu_custom_call.1} parent=11 // pred_check
          %p169 = pneg %p65
        $region14: #{tpu_custom_call.1} parent=11 // pred_check_branch
          %171 = sbr.rel (%p169) target = $region16
        $region15: #{tpu_custom_call.1} parent=11 // pred_region
          %s173 = ssub.s32 1024, 1024
          %174 = vsyncadd [#allocation6], %s173
          %s175 = sshll.u32 [#allocation5], 4
          %s176 = int_to_ptr.vmem [resolvable:$true] %s175
          %181 = dma.hbm_to_vmem [thread:$0]  %s1, 1024, %s176, [#allocation6], 64, 64, 4
        $region16: #{tpu_custom_call.1} parent=11 // pred_fallthru
          _
        // Predicated region
        $region17: #{tpu_custom_call.1} parent=11 // pred_check
          %p182 = pneg %p86
        $region18: #{tpu_custom_call.1} parent=11 // pred_check_branch
          %184 = sbr.rel (%p182) target = $region20
        $region19: #{tpu_custom_call.1} parent=11 // pred_region
          _
        $region20: #{tpu_custom_call.1} parent=11 // pred_fallthru
          _
        // Predicated region
        $region21: #{tpu_custom_call.1} parent=11 // pred_check
          %p185 = pneg %p107
        $region22: #{tpu_custom_call.1} parent=11 // pred_check_branch
          %187 = sbr.rel (%p185) target = $region24
        $region23: #{tpu_custom_call.1} parent=11 // pred_region
          _
        $region24: #{tpu_custom_call.1} parent=11 // pred_fallthru
          _
        // Predicated region
        $region25: #{tpu_custom_call.1} parent=11 // pred_check
          %p188 = pneg %p128
        $region26: #{tpu_custom_call.1} parent=11 // pred_check_branch
          %190 = sbr.rel (%p188) target = $region28
        $region27: #{tpu_custom_call.1} parent=11 // pred_region
          _
        $region28: #{tpu_custom_call.1} parent=11 // pred_fallthru
          _
      $region12: #{tpu_custom_call.1} parent=5 // pred_fallthru
        _
      %p191 = scmp.lt.s32.totalorder %s18, 2
      // Predicated region
      $region29: #{tpu_custom_call.1} parent=5 // pred_check
        %p192 = pneg %p191
      $region30: #{tpu_custom_call.1} parent=5 // pred_check_branch
        %194 = sbr.rel (%p192) target = $region32
      $region31: #{tpu_custom_call.1} parent=5 // pred_region
        // Predicated region
        $region33: #{tpu_custom_call.1} parent=31 // pred_check
          %p195 = pneg %p38
        $region34: #{tpu_custom_call.1} parent=31 // pred_check_branch
          %197 = sbr.rel (%p195) target = $region36
        $region35: #{tpu_custom_call.1} parent=31 // pred_region
          %s198 = sand.u32 %s28, 1
          %s199 = scalar_lea.sflag [#allocation3], %s198
          %s200 = sand.u32 %s28, 1
          %s201 = smul.addr %s200, 8
          %s202 = scalar_lea.vmem [#allocation2], %s201
          %s204 = ssub.s32 128, 128
          %205 = vsyncadd %s199, %s204
          %s206 = smul.addr %s18, 128
          %s207 = scalar_lea.hbm %s0, %s206
          %s209 = sshll.u32 %s202, 4
          %s210 = int_to_ptr.vmem [resolvable:$true] %s209
          %212 = dma.hbm_to_vmem [thread:$0]  %s207, 128, %s210, %s199
        $region36: #{tpu_custom_call.1} parent=31 // pred_fallthru
          _
      $region32: #{tpu_custom_call.1} parent=5 // pred_fallthru
        _
      %p213 = scmp.le.s32.totalorder 1, %s18
      %p214 = scmp.lt.s32.totalorder %s18, 3
      %p215 = pnand %p213, %p214
      %p216 = pneg %p215
      // Predicated region
      $region37: #{tpu_custom_call.1} parent=5 // pred_check
        _
      $region38: #{tpu_custom_call.1} parent=5 // pred_check_branch
        %218 = sbr.rel (%p215) target = $region40
      $region39: #{tpu_custom_call.1} parent=5 // pred_region
        %s219 = ssub.s32 %s18, 1
        %s220 = sand.u32 %s31, 1
        %s221 = scalar_lea.sflag [#allocation3], %s220
        %s222 = sand.u32 %s31, 1
        %s223 = smul.addr %s222, 8
        %s224 = scalar_lea.vmem [#allocation2], %s223
        // Predicated region
        $region41: #{tpu_custom_call.1} parent=39 // pred_check
          %p225 = pneg %p44
        $region42: #{tpu_custom_call.1} parent=39 // pred_check_branch
          %227 = sbr.rel (%p225) target = $region44
        $region43: #{tpu_custom_call.1} parent=39 // pred_region
          %228 = dma.done %s221, 128
        $region44: #{tpu_custom_call.1} parent=39 // pred_fallthru
          _
        // Predicated region
        $region45: #{tpu_custom_call.1} parent=39 // pred_check
          %p229 = pneg %p65
        $region46: #{tpu_custom_call.1} parent=39 // pred_check_branch
          %231 = sbr.rel (%p229) target = $region48
        $region47: #{tpu_custom_call.1} parent=39 // pred_region
          %232 = dma.done [#allocation6], 1024
        $region48: #{tpu_custom_call.1} parent=39 // pred_fallthru
          _
        %s233 = sand.u32 %s31, 1
        %s234 = scalar_lea.sflag [#allocation3], %s233
        %s235 = sand.u32 %s31, 1
        %s236 = smul.addr %s235, 8
        %s237 = scalar_lea.vmem [#allocation2], %s236
        %p238 = pneg %p44
        %p239 = pneg %p41
        %p240 = pneg %p65
        %p241 = pneg %p62
        %p242 = pneg %p86
        %p243 = pneg %p83
        %p244 = pneg %p107
        %p245 = pneg %p104
        %p246 = pneg %p128
        %p247 = pneg %p125
        %p248 = pneg %p154
        %p249 = pneg %p151
        %s250 = sand.u32 %s141, 1
        %s251 = scalar_lea.sflag [#allocation4], %s250
        %s252 = sand.u32 %s141, 1
        %s253 = smul.addr %s252, 8
        %s254 = scalar_lea.vmem [#allocation7], %s253
        %v256 = vld [vmem:[%s224] sm:$0xff]
        %v257 = vpack.c.bf16 %v256, %v256
        %v258 = vld [vmem:[#allocation5] sm:$0xf]
        %v259 = vld [vmem:[#allocation5 + $0x4] sm:$0xf]
        %v260 = vld [vmem:[#allocation5 + $0x8] sm:$0xf]
        %v261 = vld [vmem:[#allocation5 + $0xc] sm:$0xf]
        %v262 = vld [vmem:[#allocation5 + $0x10] sm:$0xf]
        %v263 = vld [vmem:[#allocation5 + $0x14] sm:$0xf]
        %v264 = vld [vmem:[#allocation5 + $0x18] sm:$0xf]
        %v265 = vld [vmem:[#allocation5 + $0x1c] sm:$0xf]
        %v266 = vld [vmem:[#allocation5 + $0x20] sm:$0xf]
        %v267 = vld [vmem:[#allocation5 + $0x24] sm:$0xf]
        %v268 = vld [vmem:[#allocation5 + $0x28] sm:$0xf]
        %v269 = vld [vmem:[#allocation5 + $0x2c] sm:$0xf]
        %v270 = vld [vmem:[#allocation5 + $0x30] sm:$0xf]
        %v271 = vld [vmem:[#allocation5 + $0x34] sm:$0xf]
        %v272 = vld [vmem:[#allocation5 + $0x38] sm:$0xf]
        %v273 = vld [vmem:[#allocation5 + $0x3c] sm:$0xf]
        %v290 = vunpack.c.l.b16 %v258
        %v291 = vunpack.c.l.b16 %v259
        %v292 = vunpack.c.l.b16 %v260
        %v293 = vunpack.c.l.b16 %v261
        %v294 = vunpack.c.l.b16 %v262
        %v295 = vunpack.c.l.b16 %v263
        %v296 = vunpack.c.l.b16 %v264
        %v297 = vunpack.c.l.b16 %v265
        %v298 = vunpack.c.l.b16 %v266
        %v299 = vunpack.c.l.b16 %v267
        %v300 = vunpack.c.l.b16 %v268
        %v301 = vunpack.c.l.b16 %v269
        %v302 = vunpack.c.l.b16 %v270
        %v303 = vunpack.c.l.b16 %v271
        %v304 = vunpack.c.l.b16 %v272
        %v305 = vunpack.c.l.b16 %v273
        %v306 = vpack.c.b16 %v291, %v290
        %v307 = vpack.c.b16 %v293, %v292
        %v308 = vpack.c.b16 %v295, %v294
        %v309 = vpack.c.b16 %v297, %v296
        %v310 = vpack.c.b16 %v299, %v298
        %v311 = vpack.c.b16 %v301, %v300
        %v312 = vpack.c.b16 %v303, %v302
        %v313 = vpack.c.b16 %v305, %v304
        %322 = vmatprep.subr.bf16.mxu0 0
        %323 = vmatpush1.bf16.msra.mxu0 %v313
        %324 = vmatprep.subr.bf16.mxu0 0
        %325 = vmatpush1.bf16.msra.mxu0 %v312
        %326 = vmatprep.subr.bf16.mxu0 0
        %327 = vmatpush1.bf16.msra.mxu0 %v311
        %328 = vmatprep.subr.bf16.mxu0 0
        %329 = vmatpush1.bf16.msra.mxu0 %v310
        %330 = vmatprep.subr.bf16.mxu0 0
        %331 = vmatpush1.bf16.msra.mxu0 %v309
        %332 = vmatprep.subr.bf16.mxu0 0
        %333 = vmatpush1.bf16.msra.mxu0 %v308
        %334 = vmatprep.subr.bf16.mxu0 0
        %335 = vmatpush1.bf16.msra.mxu0 %v307
        %336 = vmatprep.subr.bf16.mxu0 0
        %337 = vmatpush1.bf16.msra.mxu0 %v306
        %338 = vmatprep.subr.bf16.mxu0 0
        %339 = vmatpush2.bf16.msra.mxu0 0
        %340 = vmatprep.subr.bf16.mxu0 0
        %341 = vmatpush2.bf16.msra.mxu0 0
        %342 = vmatprep.subr.bf16.mxu0 0
        %343 = vmatpush2.bf16.msra.mxu0 0
        %344 = vmatprep.subr.bf16.mxu0 0
        %345 = vmatpush2.bf16.msra.mxu0 0
        %346 = vmatprep.subr.bf16.mxu0 0
        %347 = vmatpush2.bf16.msra.mxu0 0
        %348 = vmatprep.subr.bf16.mxu0 0
        %349 = vmatpush2.bf16.msra.mxu0 0
        %350 = vmatprep.subr.bf16.mxu0 0
        %351 = vmatpush2.bf16.msra.mxu0 0
        %352 = vmatprep.subr.bf16.mxu0 0
        %353 = vmatpush2.bf16.msra.mxu0 0
        %354 = vmatprep.mubr.bf16.mxu0 0
        %355 = vmatmul.mubr.bf16.gmra.mxu0 %v257
        %v356 = vpop.f32.mrf.mxu0
        %v357 = vadd.f32 0.0, %v356
        %v358 = vpop.f32.mrf.mxu0
        %v359 = vpop.f32.mrf.mxu0
        %v360 = vpop.f32.mrf.mxu0
        %361 = vdwg.mxu0
        %v362 = vadd.f32 %v256, %v357
        %v363 = vld [vmem:[%s2] sm:$0x1]
        %v365 = vlaneseq
        %v366 = vshrl.u32 %v365, 7
        %v367 = vsub.s32 0, %v366
        %v368 = vrot.slane %v363, %v367
        %v370 = vadd.f32 %v362, %v368
        %371 = vadd.xlane.f32.xlu0 %v370
        %v372 = vpop.xlane.xlu0 %371
        %v373 = vrcp.pop 128.0
        %v374 = vmul.f32 %v372, %v373
        %v375 = vsub.f32 %v370, %v374
        %v376 = vmul.f32 %v375, %v375
        %377 = vadd.xlane.f32.xlu0 %v376
        %v378 = vpop.xlane.xlu0 %377
        %v379 = vmul.f32 %v378, 0.007874016
        %v380 = vrsqrt.pop %v379
        %v381 = vmul.f32 %v379, %v380
        %vm382 = vcmp.eq.f32.partialorder %v379, inf
        %v383 = vsel %vm382, %v379, %v381
        %vm384 = vcmp.eq.f32.partialorder %v379, 0.0
        %v385 = vand.u32 %v379, 2147483648
        %v386 = vsel %vm384, %v385, %v383
        %v387 = vadd.f32 %v386, 1e-06
        %v388 = vrcp.pop %v387
        %v389 = vld [vmem:[%s3] sm:$0x1]
        %v391 = vlaneseq
        %v392 = vshrl.u32 %v391, 7
        %v393 = vsub.s32 0, %v392
        %v394 = vrot.slane %v389, %v393
        %v396 = vmul.f32 %v394, %v375
        %v397 = vmul.f32 %v396, %v388
        %v398 = vld [vmem:[%s4] sm:$0x1]
        %v400 = vlaneseq
        %v401 = vshrl.u32 %v400, 7
        %v402 = vsub.s32 0, %v401
        %v403 = vrot.slane %v398, %v402
        %v405 = vadd.f32 %v397, %v403
        %406 = vst [vmem:[%s254] sm:$0xff] %v405
        %s407 = sand.u32 %s141, 1
        %s408 = scalar_lea.sflag [#allocation4], %s407
        %s409 = sand.u32 %s141, 1
        %s410 = smul.addr %s409, 8
        %s411 = scalar_lea.vmem [#allocation7], %s410
        // Predicated region
        $region49: #{tpu_custom_call.1} parent=39 // pred_check
          %p412 = pneg %p151
        $region50: #{tpu_custom_call.1} parent=39 // pred_check_branch
          %414 = sbr.rel (%p412) target = $region52
        $region51: #{tpu_custom_call.1} parent=39 // pred_region
          %s416 = ssub.s32 128, 128
          %417 = vsyncadd %s408, %s416
          %s418 = smul.addr %s23, 128
          %s419 = scalar_lea.hbm %s5, %s418
          %s421 = sshll.u32 %s411, 4
          %s422 = int_to_ptr.vmem [resolvable:$true] %s421
          %424 = dma.vmem_to_hbm [thread:$0]  %s422, 128, %s419, %s408
        $region52: #{tpu_custom_call.1} parent=39 // pred_fallthru
          _
      $region40: #{tpu_custom_call.1} parent=5 // pred_fallthru
        _
      %p425 = scmp.le.s32.totalorder 2, %s18
      // Predicated region
      $region53: #{tpu_custom_call.1} parent=5 // pred_check
        %p426 = pneg %p425
      $region54: #{tpu_custom_call.1} parent=5 // pred_check_branch
        %428 = sbr.rel (%p426) target = $region56
      $region55: #{tpu_custom_call.1} parent=5 // pred_region
        %s429 = ssub.s32 %s18, 2
        // Predicated region
        $region57: #{tpu_custom_call.1} parent=55 // pred_check
          %p430 = pneg %p157
        $region58: #{tpu_custom_call.1} parent=55 // pred_check_branch
          %432 = sbr.rel (%p430) target = $region60
        $region59: #{tpu_custom_call.1} parent=55 // pred_region
          %s433 = sand.u32 %s142, 1
          %s434 = scalar_lea.sflag [#allocation4], %s433
          %s435 = sand.u32 %s142, 1
          %s436 = smul.addr %s435, 8
          %s437 = scalar_lea.vmem [#allocation7], %s436
          %438 = dma.done %s434, 128
        $region60: #{tpu_custom_call.1} parent=55 // pred_fallthru
          _
      $region56: #{tpu_custom_call.1} parent=5 // pred_fallthru
        _
    $region6: #{tpu_custom_call.1} parent=1 // loop_footer
      %s22 = sadd.s32 1, %s18
    $region7: #{tpu_custom_call.1} parent=1 // loop_footer_branch
      %17 = sbr.rel target = $region3
    $region8: #{tpu_custom_call.1} parent=1 // loop_exit
      _
    %439 = vsyncpa [#allocation3], 1
    %s440 = scalar_lea.sflag [#allocation3], 1
    %441 = vsyncpa %s440, 1
    %442 = vsyncpa [#allocation6], 1
    %443 = vsyncpa [#allocation4], 1
    %s444 = scalar_lea.sflag [#allocation4], 1
    %445 = vsyncpa %s444, 1

</llo_original>
